<compile_context>
chip_gen: v7x
topology: tpu7x:2x2x1
jax: 0.10.0
libtpu: 0.0.40
codegen_flags: <defaults>
</compile_context>

<pallas_src>
import functools

import jax
import jax.numpy as jnp
from jax.experimental import pallas as pl
from jax.experimental.pallas import tpu as pltpu


def _round_up(a: int, b: int) -> int:
    return (a + b - 1) // b * b


# ---------------------------------------------------------------------------
# Kernel
# ---------------------------------------------------------------------------
def _fused_mlp_kernel(x_ref, w_ref, b_ref, o_ref, h_ref, *, num_layers: int,
                      n_out_p: int):
    # x_ref: (tm, D)   bf16 input row tile (lane-dense padded)
    # w_ref: (L, D, D) bf16 stacked weights, fully VMEM-resident
    # b_ref: (L, 1, D) f32 stacked biases
    # o_ref: (tm, No)  f32 lane-dense output slab (No = round_up(n_out, 128))
    # h_ref: (tm, D)   bf16 VMEM scratch for the hidden activation
    for l in range(num_layers):
        src = x_ref if l == 0 else h_ref          # both already bf16
        if l < num_layers - 1:
            acc = jnp.dot(src[...], w_ref[l],
                          preferred_element_type=jnp.float32)   # MXU, f32 acc
            acc = acc + b_ref[l]                                 # f32 epilogue
            h_ref[...] = jnp.maximum(acc, 0.0).astype(jnp.bfloat16)
        else:
            # Only the first No weight columns are real: halve last-layer MXU
            # work and write a 128-wide lane-dense slab (no masked stores).
            acc = jnp.dot(src[...], w_ref[l, :, :n_out_p],
                          preferred_element_type=jnp.float32)
            acc = acc + b_ref[l, :, :n_out_p]
            o_ref[...] = acc.astype(o_ref.dtype)


# ---------------------------------------------------------------------------
# Tiling / packing helpers
# ---------------------------------------------------------------------------
def _choose_row_tiling(M: int, D: int, No: int, L: int):
    """Pick row tile tm, padded row count Mp and a VMEM limit per generation."""
    kind = ""
    try:
        dev = jax.devices()[0]
        if getattr(dev, "platform", "") == "tpu":
            kind = dev.device_kind.lower()
    except Exception:
        pass  # AOT / mock / non-TPU: fall through to the conservative default.

    if "v7" in kind:
        budget, phys, multicore = 44 << 20, 56 << 20, True   # 64 MiB/TC part
    elif "v5" in kind or "v6" in kind:
        budget, phys, multicore = 64 << 20, 112 << 20, False  # 128 MiB VMEM
    else:
        budget, phys, multicore = 32 << 20, 56 << 20, False   # conservative

    Mp = _round_up(max(M, 8), 8)

    # Resident constants: single-buffered bf16 weights + f32 biases.
    fixed = L * D * D * 2 + L * D * 4
    # Per row: double-buffered bf16 input tile, double-buffered f32 output slab,
    # bf16 hidden scratch, and the compiler-materialized f32 matmul accumulator.
    per_row = 2 * D * 2 + 2 * No * 4 + D * 2 + D * 4

    if fixed > budget // 2:
        # Large-D fallback: grow the limit (weights must be resident) instead of
        # letting tm_cap go negative and the compile fail.
        budget = min(phys, fixed + 256 * per_row + (4 << 20))
        # TODO(synk): for very large D, switch to a layer/K-chunked
        #             pltpu.emit_pipeline over weight slices instead.

    avail = max(0, int(budget * 0.8) - fixed)
    tm = min(512, max(8, avail // per_row), Mp)
    tm = max(8, (tm // 8) * 8)

    # v7x only: 2 TensorCores/chip -> ensure >= 2 "parallel" grid steps, but
    # only when the post-split tile stays >= 256 rows.  On single-TC v5e/v6e
    # the grid is a serial loop, so keep one big tile.
    if multicore and Mp // tm < 2 and Mp >= 512:
        tm = max(256, _round_up(Mp // 2, 8))

    Mp = _round_up(Mp, tm)
    return tm, Mp, int(budget)


def pack_mlp_params(params):
    """Pack layer weights/biases once at init into uniform VMEM-friendly stacks."""
    L = len(params)
    K = params[0][0].shape[0]
    n_out = params[-1][0].shape[1]
    dims = [K] + [w.shape[1] for (w, _) in params]
    D = _round_up(max(dims), 128)          # lane-dense uniform feature dim
    No = _round_up(n_out, 128)             # lane-dense output slab width

    w_stack = jnp.zeros((L, D, D), jnp.bfloat16)
    b_stack = jnp.zeros((L, 1, D), jnp.float32)
    for l, (w, b) in enumerate(params):
        k, n = w.shape
        w_stack = w_stack.at[l, :k, :n].set(w.astype(jnp.bfloat16))
        b_stack = b_stack.at[l, 0, :n].set(b.astype(jnp.float32))
    return dict(w=w_stack, b=b_stack, L=L, K=K, D=D, No=No, n_out=n_out)


# ---------------------------------------------------------------------------
# Wrapper
# ---------------------------------------------------------------------------
def fused_mlp_forward(packed, x):
    """y = MLP(x): Linear(+ReLU) * (L-1) + Linear, fused in one pallas_call.

    All leading axes of x (batch, queries, and — for DETR aux outputs — the
    decoder-layer axis) are folded into the row dimension, so a single kernel
    launch amortizes the weight fetch across every head.
    """
    lead_shape = x.shape[:-1]
    K = x.shape[-1]
    assert K == packed["K"], (K, packed["K"])
    x2d = x.reshape(-1, K)
    M = x2d.shape[0]

    L, D, No, n_out = packed["L"], packed["D"], packed["No"], packed["n_out"]
    w_stack, b_stack = packed["w"], packed["b"]

    tm, Mp, vmem_limit = _choose_row_tiling(M, D, No, L)

    # bf16 activations into the kernel: skip the pad pass entirely when no
    # padding is needed, otherwise fuse the cast into the single pad op.
    if K == D and M == Mp:
        x_pad = x2d.astype(jnp.bfloat16)
    else:
        x_pad = jnp.zeros((Mp, D), jnp.bfloat16).at[:M, :K].set(
            x2d.astype(jnp.bfloat16))

    def build(single_buffer_consts: bool):
        const_kw = ({"pipeline_mode": pl.Buffered(1)}
                    if single_buffer_consts and hasattr(pl, "Buffered") else {})
        return pl.pallas_call(
            functools.partial(_fused_mlp_kernel, num_layers=L, n_out_p=No),
            out_shape=jax.ShapeDtypeStruct((Mp, No), jnp.float32),
            grid=(Mp // tm,),
            in_specs=[
                pl.BlockSpec((tm, D), lambda i: (i, 0)),       # row tile
                pl.BlockSpec((L, D, D), lambda i: (0, 0, 0),   # resident weights
                             **const_kw),
                pl.BlockSpec((L, 1, D), lambda i: (0, 0, 0),   # resident biases
                             **const_kw),
            ],
            out_specs=pl.BlockSpec((tm, No), lambda i: (i, 0)),
            scratch_shapes=[pltpu.VMEM((tm, D), jnp.bfloat16)],  # hidden act
            compiler_params=pltpu.CompilerParams(
                dimension_semantics=("parallel",),
                vmem_limit_bytes=vmem_limit),
        )

    try:
        out_pad = build(True)(x_pad, w_stack, b_stack)
    except Exception:
        # jax build without BlockSpec pipeline_mode / Buffered(1) support:
        # fall back to default double-buffered constant blocks.
        out_pad = build(False)(x_pad, w_stack, b_stack)

    out = out_pad[:M, :n_out]
    return out.reshape(*lead_shape, n_out)


# ---------------------------------------------------------------------------
# Params + pure-JAX reference
# ---------------------------------------------------------------------------
def init_mlp_params(key, input_dim, hidden_dim, output_dim, num_layers,
                    dtype=jnp.float32):
    """nn.Linear-shaped init; weights kept as (in, out) so kernel does x @ w."""
    h = [hidden_dim] * (num_layers - 1)
    dims_in = [input_dim] + h
    dims_out = h + [output_dim]
    params = []
    for n, k in zip(dims_in, dims_out):
        key, kw, kb = jax.random.split(key, 3)
        bound = 1.0 / jnp.sqrt(jnp.asarray(n, dtype))
        w = jax.random.uniform(kw, (n, k), dtype, -bound, bound)
        b = jax.random.uniform(kb, (k,), dtype, -bound, bound)
        params.append((w, b))
    return params


def mlp_reference(params, x):
    """Pure-JAX reference with identical math (bf16 MXU operands, f32 acc)."""
    L = len(params)
    for i, (w, b) in enumerate(params):
        y = jnp.dot(x.astype(jnp.bfloat16), w.astype(jnp.bfloat16),
                    preferred_element_type=jnp.float32) + b.astype(jnp.float32)
        x = jnp.maximum(y, 0.0) if i < L - 1 else y
    return x.astype(jnp.float32)


# ---------------------------------------------------------------------------
if __name__ == "__main__":
    key = jax.random.PRNGKey(0)
    # Small DETR-box-head-like shapes; the decoder-layer (aux-output) axis is
    # folded into the row dimension by the wrapper (one launch for all heads).
    dec_layers, batch, queries = 3, 2, 8
    input_dim, hidden_dim, output_dim, num_layers = 32, 32, 4, 3

    kx, kp = jax.random.split(key)
    x = jax.random.normal(kx, (dec_layers, batch, queries, input_dim),
                          jnp.float32)
    params = init_mlp_params(kp, input_dim, hidden_dim, output_dim, num_layers)
    packed = pack_mlp_params(params)        # packed once at init, not per call

    out = fused_mlp_forward(packed, x)
    out = jax.block_until_ready(out)

    ref = mlp_reference(params, x)
    assert out.shape == (dec_layers, batch, queries, output_dim), out.shape
    assert jnp.allclose(out, ref, atol=1e-3, rtol=1e-3), "mismatch vs reference"

    print("KERNEL_OK")
</pallas_src>

<mosaic_0001>
module attributes {stable_mosaic.version = 11 : i64} {
  func.func @_fused_mlp_kernel(%arg0: i32, %arg1: memref<48x128xbf16, #tpu.memory_space<vmem>>, %arg2: memref<3x128x128xbf16, #tpu.memory_space<vmem>>, %arg3: memref<3x1x128xf32, #tpu.memory_space<vmem>>, %arg4: memref<48x128xf32, #tpu.memory_space<vmem>>, %arg5: memref<48x128xbf16, #tpu.memory_space<vmem>>) attributes {dimension_semantics = [#tpu.dimension_semantics<parallel>], iteration_bounds = array<i64: 1>, scalar_prefetch = 0 : i64, scratch_operands = 1 : i64, tpu.core_type = #tpu.core_type<tc>, window_params = [{transform_indices = @transform_0, window_bounds = array<i64: 48, 128>}, {pipeline_mode = #tpu.pipeline_mode<synchronous>, transform_indices = @transform_1, window_bounds = array<i64: 3, 128, 128>}, {pipeline_mode = #tpu.pipeline_mode<synchronous>, transform_indices = @transform_2, window_bounds = array<i64: 3, 1, 128>}, {transform_indices = @transform_3, window_bounds = array<i64: 48, 128>}]} {
    %c0 = arith.constant 0 : index
    %c0_0 = arith.constant 0 : index
    %0 = vector.load %arg1[%c0, %c0_0] : memref<48x128xbf16, #tpu.memory_space<vmem>>, vector<48x128xbf16>
    %c0_1 = arith.constant 0 : index
    %c0_2 = arith.constant 0 : index
    %c0_3 = arith.constant 0 : index
    %1 = vector.load %arg2[%c0_1, %c0_2, %c0_3] : memref<3x128x128xbf16, #tpu.memory_space<vmem>>, vector<1x128x128xbf16>
    %2 = vector.shape_cast %1 : vector<1x128x128xbf16> to vector<128x128xbf16>
    %cst = arith.constant dense<0.000000e+00> : vector<48x128xf32>
    %3 = tpu.matmul %0, %2, %cst {dimension_numbers = #tpu.dot_dimension_numbers<[1], [0], [0], [1], [0, 0, 1, 1], [], []>} : vector<48x128xbf16>, vector<128x128xbf16>, vector<48x128xf32> -> vector<48x128xf32>
    %c0_4 = arith.constant 0 : index
    %c0_5 = arith.constant 0 : index
    %c0_6 = arith.constant 0 : index
    %4 = vector.load %arg3[%c0_4, %c0_5, %c0_6] : memref<3x1x128xf32, #tpu.memory_space<vmem>>, vector<1x1x128xf32>
    %5 = vector.shape_cast %4 : vector<1x1x128xf32> to vector<1x128xf32>
    %6 = vector.broadcast %5 : vector<1x128xf32> to vector<48x128xf32>
    %7 = arith.addf %3, %6 : vector<48x128xf32>
    %cst_7 = arith.constant 0.000000e+00 : f32
    %8 = vector.broadcast %cst_7 : f32 to vector<48x128xf32>
    %9 = arith.maximumf %7, %8 : vector<48x128xf32>
    %10 = arith.truncf %9 : vector<48x128xf32> to vector<48x128xbf16>
    %c0_8 = arith.constant 0 : index
    %c0_9 = arith.constant 0 : index
    %11 = vector.load %arg5[%c0_8, %c0_9] : memref<48x128xbf16, #tpu.memory_space<vmem>>, vector<48x128xbf16>
    tpu.vector_store %arg5[%c0_8, %c0_9], %10 {strides = array<i32>} : memref<48x128xbf16, #tpu.memory_space<vmem>>, vector<48x128xbf16>,
    %c0_10 = arith.constant 0 : index
    %c0_11 = arith.constant 0 : index
    %12 = vector.load %arg5[%c0_10, %c0_11] : memref<48x128xbf16, #tpu.memory_space<vmem>>, vector<48x128xbf16>
    %c1 = arith.constant 1 : index
    %c0_12 = arith.constant 0 : index
    %c0_13 = arith.constant 0 : index
    %13 = vector.load %arg2[%c1, %c0_12, %c0_13] : memref<3x128x128xbf16, #tpu.memory_space<vmem>>, vector<1x128x128xbf16>
    %14 = vector.shape_cast %13 : vector<1x128x128xbf16> to vector<128x128xbf16>
    %cst_14 = arith.constant dense<0.000000e+00> : vector<48x128xf32>
    %15 = tpu.matmul %12, %14, %cst_14 {dimension_numbers = #tpu.dot_dimension_numbers<[1], [0], [0], [1], [0, 0, 1, 1], [], []>} : vector<48x128xbf16>, vector<128x128xbf16>, vector<48x128xf32> -> vector<48x128xf32>
    %c1_15 = arith.constant 1 : index
    %c0_16 = arith.constant 0 : index
    %c0_17 = arith.constant 0 : index
    %16 = vector.load %arg3[%c1_15, %c0_16, %c0_17] : memref<3x1x128xf32, #tpu.memory_space<vmem>>, vector<1x1x128xf32>
    %17 = vector.shape_cast %16 : vector<1x1x128xf32> to vector<1x128xf32>
    %18 = vector.broadcast %17 : vector<1x128xf32> to vector<48x128xf32>
    %19 = arith.addf %15, %18 : vector<48x128xf32>
    %cst_18 = arith.constant 0.000000e+00 : f32
    %20 = vector.broadcast %cst_18 : f32 to vector<48x128xf32>
    %21 = arith.maximumf %19, %20 : vector<48x128xf32>
    %22 = arith.truncf %21 : vector<48x128xf32> to vector<48x128xbf16>
    %c0_19 = arith.constant 0 : index
    %c0_20 = arith.constant 0 : index
    %23 = vector.load %arg5[%c0_19, %c0_20] : memref<48x128xbf16, #tpu.memory_space<vmem>>, vector<48x128xbf16>
    tpu.vector_store %arg5[%c0_19, %c0_20], %22 {strides = array<i32>} : memref<48x128xbf16, #tpu.memory_space<vmem>>, vector<48x128xbf16>,
    %c0_21 = arith.constant 0 : index
    %c0_22 = arith.constant 0 : index
    %24 = vector.load %arg5[%c0_21, %c0_22] : memref<48x128xbf16, #tpu.memory_space<vmem>>, vector<48x128xbf16>
    %c2 = arith.constant 2 : index
    %c0_23 = arith.constant 0 : index
    %c0_24 = arith.constant 0 : index
    %25 = vector.load %arg2[%c2, %c0_23, %c0_24] : memref<3x128x128xbf16, #tpu.memory_space<vmem>>, vector<1x128x128xbf16>
    %26 = vector.shape_cast %25 : vector<1x128x128xbf16> to vector<128x128xbf16>
    %cst_25 = arith.constant dense<0.000000e+00> : vector<48x128xf32>
    %27 = tpu.matmul %24, %26, %cst_25 {dimension_numbers = #tpu.dot_dimension_numbers<[1], [0], [0], [1], [0, 0, 1, 1], [], []>} : vector<48x128xbf16>, vector<128x128xbf16>, vector<48x128xf32> -> vector<48x128xf32>
    %c2_26 = arith.constant 2 : index
    %c0_27 = arith.constant 0 : index
    %c0_28 = arith.constant 0 : index
    %28 = vector.load %arg3[%c2_26, %c0_27, %c0_28] : memref<3x1x128xf32, #tpu.memory_space<vmem>>, vector<1x1x128xf32>
    %29 = vector.shape_cast %28 : vector<1x1x128xf32> to vector<1x128xf32>
    %30 = vector.broadcast %29 : vector<1x128xf32> to vector<48x128xf32>
    %31 = arith.addf %27, %30 : vector<48x128xf32>
    %c0_29 = arith.constant 0 : index
    %c0_30 = arith.constant 0 : index
    %32 = vector.load %arg4[%c0_29, %c0_30] : memref<48x128xf32, #tpu.memory_space<vmem>>, vector<48x128xf32>
    tpu.vector_store %arg4[%c0_29, %c0_30], %31 {strides = array<i32>} : memref<48x128xf32, #tpu.memory_space<vmem>>, vector<48x128xf32>,
    return
  }
  func.func @transform_0(%arg0: i32) -> (i32, i32) {
    %c0_i32 = arith.constant 0 : i32
    %c0_i32_0 = arith.constant 0 : i32
    return %arg0, %c0_i32 : i32, i32
  }
  func.func @transform_1(%arg0: i32) -> (i32, i32, i32) {
    %c0_i32 = arith.constant 0 : i32
    %c0_i32_0 = arith.constant 0 : i32
    %c0_i32_1 = arith.constant 0 : i32
    %c0_i32_2 = arith.constant 0 : i32
    return %c0_i32, %c0_i32_0, %c0_i32_1 : i32, i32, i32
  }
  func.func @transform_2(%arg0: i32) -> (i32, i32, i32) {
    %c0_i32 = arith.constant 0 : i32
    %c0_i32_0 = arith.constant 0 : i32
    %c0_i32_1 = arith.constant 0 : i32
    %c0_i32_2 = arith.constant 0 : i32
    return %c0_i32, %c0_i32_0, %c0_i32_1 : i32, i32, i32
  }
  func.func @transform_3(%arg0: i32) -> (i32, i32) {
    %c0_i32 = arith.constant 0 : i32
    %c0_i32_0 = arith.constant 0 : i32
    return %arg0, %c0_i32 : i32, i32
  }
}

module attributes {stable_mosaic.version = 11 : i64} {
  func.func @_fused_mlp_kernel(%arg0: i32, %arg1: memref<48x128xbf16, #tpu.memory_space<vmem>>, %arg2: memref<3x128x128xbf16, #tpu.memory_space<vmem>>, %arg3: memref<3x1x128xf32, #tpu.memory_space<vmem>>, %arg4: memref<48x128xf32, #tpu.memory_space<vmem>>, %arg5: memref<48x128xbf16, #tpu.memory_space<vmem>>) attributes {dimension_semantics = [#tpu.dimension_semantics<parallel>], iteration_bounds = array<i64: 1>, scalar_prefetch = 0 : i64, scratch_operands = 1 : i64, tpu.core_type = #tpu.core_type<tc>, window_params = [{transform_indices = @transform_0, window_bounds = array<i64: 48, 128>}, {pipeline_mode = #tpu.pipeline_mode<synchronous>, transform_indices = @transform_1, window_bounds = array<i64: 3, 128, 128>}, {pipeline_mode = #tpu.pipeline_mode<synchronous>, transform_indices = @transform_2, window_bounds = array<i64: 3, 1, 128>}, {transform_indices = @transform_3, window_bounds = array<i64: 48, 128>}]} {
    %c0 = arith.constant 0 : index
    %c0_0 = arith.constant 0 : index
    %0 = vector.load %arg1[%c0, %c0_0] : memref<48x128xbf16, #tpu.memory_space<vmem>>, vector<48x128xbf16>
    %c0_1 = arith.constant 0 : index
    %c0_2 = arith.constant 0 : index
    %c0_3 = arith.constant 0 : index
    %1 = vector.load %arg2[%c0_1, %c0_2, %c0_3] : memref<3x128x128xbf16, #tpu.memory_space<vmem>>, vector<1x128x128xbf16>
    %2 = vector.shape_cast %1 : vector<1x128x128xbf16> to vector<128x128xbf16>
    %cst = arith.constant dense<0.000000e+00> : vector<48x128xf32>
    %3 = tpu.matmul %0, %2, %cst {dimension_numbers = #tpu.dot_dimension_numbers<[1], [0], [0], [1], [0, 0, 1, 1], [], []>} : vector<48x128xbf16>, vector<128x128xbf16>, vector<48x128xf32> -> vector<48x128xf32>
    %c0_4 = arith.constant 0 : index
    %c0_5 = arith.constant 0 : index
    %c0_6 = arith.constant 0 : index
    %4 = vector.load %arg3[%c0_4, %c0_5, %c0_6] : memref<3x1x128xf32, #tpu.memory_space<vmem>>, vector<1x1x128xf32>
    %5 = vector.shape_cast %4 : vector<1x1x128xf32> to vector<1x128xf32>
    %6 = vector.broadcast %5 : vector<1x128xf32> to vector<48x128xf32>
    %7 = arith.addf %3, %6 : vector<48x128xf32>
    %cst_7 = arith.constant 0.000000e+00 : f32
    %8 = vector.broadcast %cst_7 : f32 to vector<48x128xf32>
    %9 = arith.maximumf %7, %8 : vector<48x128xf32>
    %10 = arith.truncf %9 : vector<48x128xf32> to vector<48x128xbf16>
    %c0_8 = arith.constant 0 : index
    %c0_9 = arith.constant 0 : index
    %11 = vector.load %arg5[%c0_8, %c0_9] : memref<48x128xbf16, #tpu.memory_space<vmem>>, vector<48x128xbf16>
    tpu.vector_store %arg5[%c0_8, %c0_9], %10 {strides = array<i32>} : memref<48x128xbf16, #tpu.memory_space<vmem>>, vector<48x128xbf16>,
    %c0_10 = arith.constant 0 : index
    %c0_11 = arith.constant 0 : index
    %12 = vector.load %arg5[%c0_10, %c0_11] : memref<48x128xbf16, #tpu.memory_space<vmem>>, vector<48x128xbf16>
    %c1 = arith.constant 1 : index
    %c0_12 = arith.constant 0 : index
    %c0_13 = arith.constant 0 : index
    %13 = vector.load %arg2[%c1, %c0_12, %c0_13] : memref<3x128x128xbf16, #tpu.memory_space<vmem>>, vector<1x128x128xbf16>
    %14 = vector.shape_cast %13 : vector<1x128x128xbf16> to vector<128x128xbf16>
    %cst_14 = arith.constant dense<0.000000e+00> : vector<48x128xf32>
    %15 = tpu.matmul %12, %14, %cst_14 {dimension_numbers = #tpu.dot_dimension_numbers<[1], [0], [0], [1], [0, 0, 1, 1], [], []>} : vector<48x128xbf16>, vector<128x128xbf16>, vector<48x128xf32> -> vector<48x128xf32>
    %c1_15 = arith.constant 1 : index
    %c0_16 = arith.constant 0 : index
    %c0_17 = arith.constant 0 : index
    %16 = vector.load %arg3[%c1_15, %c0_16, %c0_17] : memref<3x1x128xf32, #tpu.memory_space<vmem>>, vector<1x1x128xf32>
    %17 = vector.shape_cast %16 : vector<1x1x128xf32> to vector<1x128xf32>
    %18 = vector.broadcast %17 : vector<1x128xf32> to vector<48x128xf32>
    %19 = arith.addf %15, %18 : vector<48x128xf32>
    %cst_18 = arith.constant 0.000000e+00 : f32
    %20 = vector.broadcast %cst_18 : f32 to vector<48x128xf32>
    %21 = arith.maximumf %19, %20 : vector<48x128xf32>
    %22 = arith.truncf %21 : vector<48x128xf32> to vector<48x128xbf16>
    %c0_19 = arith.constant 0 : index
    %c0_20 = arith.constant 0 : index
    %23 = vector.load %arg5[%c0_19, %c0_20] : memref<48x128xbf16, #tpu.memory_space<vmem>>, vector<48x128xbf16>
    tpu.vector_store %arg5[%c0_19, %c0_20], %22 {strides = array<i32>} : memref<48x128xbf16, #tpu.memory_space<vmem>>, vector<48x128xbf16>,
    %c0_21 = arith.constant 0 : index
    %c0_22 = arith.constant 0 : index
    %24 = vector.load %arg5[%c0_21, %c0_22] : memref<48x128xbf16, #tpu.memory_space<vmem>>, vector<48x128xbf16>
    %c2 = arith.constant 2 : index
    %c0_23 = arith.constant 0 : index
    %c0_24 = arith.constant 0 : index
    %25 = vector.load %arg2[%c2, %c0_23, %c0_24] : memref<3x128x128xbf16, #tpu.memory_space<vmem>>, vector<1x128x128xbf16>
    %26 = vector.shape_cast %25 : vector<1x128x128xbf16> to vector<128x128xbf16>
    %cst_25 = arith.constant dense<0.000000e+00> : vector<48x128xf32>
    %27 = tpu.matmul %24, %26, %cst_25 {dimension_numbers = #tpu.dot_dimension_numbers<[1], [0], [0], [1], [0, 0, 1, 1], [], []>} : vector<48x128xbf16>, vector<128x128xbf16>, vector<48x128xf32> -> vector<48x128xf32>
    %c2_26 = arith.constant 2 : index
    %c0_27 = arith.constant 0 : index
    %c0_28 = arith.constant 0 : index
    %28 = vector.load %arg3[%c2_26, %c0_27, %c0_28] : memref<3x1x128xf32, #tpu.memory_space<vmem>>, vector<1x1x128xf32>
    %29 = vector.shape_cast %28 : vector<1x1x128xf32> to vector<1x128xf32>
    %30 = vector.broadcast %29 : vector<1x128xf32> to vector<48x128xf32>
    %31 = arith.addf %27, %30 : vector<48x128xf32>
    %c0_29 = arith.constant 0 : index
    %c0_30 = arith.constant 0 : index
    %32 = vector.load %arg4[%c0_29, %c0_30] : memref<48x128xf32, #tpu.memory_space<vmem>>, vector<48x128xf32>
    tpu.vector_store %arg4[%c0_29, %c0_30], %31 {strides = array<i32>} : memref<48x128xf32, #tpu.memory_space<vmem>>, vector<48x128xf32>,
    return
  }
  func.func @transform_0(%arg0: i32) -> (i32, i32) {
    %c0_i32 = arith.constant 0 : i32
    %c0_i32_0 = arith.constant 0 : i32
    return %arg0, %c0_i32 : i32, i32
  }
  func.func @transform_1(%arg0: i32) -> (i32, i32, i32) {
    %c0_i32 = arith.constant 0 : i32
    %c0_i32_0 = arith.constant 0 : i32
    %c0_i32_1 = arith.constant 0 : i32
    %c0_i32_2 = arith.constant 0 : i32
    return %c0_i32, %c0_i32_0, %c0_i32_1 : i32, i32, i32
  }
  func.func @transform_2(%arg0: i32) -> (i32, i32, i32) {
    %c0_i32 = arith.constant 0 : i32
    %c0_i32_0 = arith.constant 0 : i32
    %c0_i32_1 = arith.constant 0 : i32
    %c0_i32_2 = arith.constant 0 : i32
    return %c0_i32, %c0_i32_0, %c0_i32_1 : i32, i32, i32
  }
  func.func @transform_3(%arg0: i32) -> (i32, i32) {
    %c0_i32 = arith.constant 0 : i32
    %c0_i32_0 = arith.constant 0 : i32
    return %arg0, %c0_i32 : i32, i32
  }
}

</mosaic_0001>

<llo_original>
// kernel: tpu_custom_call.1
$region0: #{tpu_custom_call.1}
  #allocation0 [shape = 'u32[]', space=smem, size = 0x4, offset = 0x4, fixed_abs, tag = 'smem constant byte address 0x4 - core index']
  #allocation1 [shape = 'u32[144,128]{1,0:T(1,128)}', space=vmem, size = 0x12000, scoped, tag = 'internal scratch']
  #allocation2 [shape = 'bf16[48,128]{1,0:T(16,128)(2,1)}', space=vmem, size = 0x3000, scoped, tag = 'scratch operand']
  %s0 = inlined_call_operand.hbm [shape: bf16[48,128], index: 0, kind: input, shape index: {}]
  %s1 = inlined_call_operand.hbm [shape: bf16[3,128,128], index: 1, kind: input, shape index: {}]
  %s2 = inlined_call_operand.vmem [shape: f32[3,1,128], index: 2, kind: input, shape index: {}]
  %s3 = inlined_call_operand.hbm [shape: f32[48,128], index: 3, kind: output, shape index: {}]
  %s4 = sld [smem:[#allocation0]]
  $region30: #{tpu_custom_call.1} parent=0
    _
  %s6 = ssub.s32 1, %s4
  %s7 = scalar_select 0, %s6, %s4
  $region1: #{tpu_custom_call.1} parent=0
    #allocation3 [shape = 'u8[12288]{0}', space=vmem, size = 0x3000, scoped, tag = 'input window, operand 0, single buffered']
    #allocation4 [shape = 's32[1]{0}', space=sflag, size = 0x4, scoped, tag = 'scoped memory for tpu_custom_call.1']
    #allocation5 [shape = 's32[1]{0}', space=sflag, size = 0x4, scoped, tag = 'scoped memory for tpu_custom_call.1']
    #allocation6 [shape = 'u8[98304]{0}', space=vmem, size = 0x18000, scoped, tag = 'input window, operand 1, single buffered']
    #allocation7 [shape = 's32[1]{0}', space=sflag, size = 0x4, scoped, tag = 'scoped memory for tpu_custom_call.1']
    #allocation8 [shape = 'u8[24576]{0}', space=vmem, size = 0x6000, scoped, tag = 'output window, operand 0, single buffered']
    %8 = vsyncpa [#allocation4], 0
    %9 = vsyncpa [#allocation7], 0
    %10 = vsyncpa [#allocation5], 0
    // Predicated region
    $region2: #{tpu_custom_call.1} parent=1 // pred_check
      _
    $region3: #{tpu_custom_call.1} parent=1 // pred_check_branch
      %12 = sbr.rel (0) target = $region5
    $region4: #{tpu_custom_call.1} parent=1 // pred_region
      %s14 = ssub.s32 384, 384
      %15 = vsyncadd [#allocation4], %s14
      %s16 = sshll.u32 [#allocation3], 4
      %s17 = int_to_ptr.vmem [resolvable:$true] %s16
      %22 = dma.hbm_to_vmem [thread:$0]  %s0, 384, %s17, [#allocation4], 64, 64, 4
    $region5: #{tpu_custom_call.1} parent=1 // pred_fallthru
      _
    // Predicated region
    $region6: #{tpu_custom_call.1} parent=1 // pred_check
      _
    $region7: #{tpu_custom_call.1} parent=1 // pred_check_branch
      %24 = sbr.rel (0) target = $region9
    $region8: #{tpu_custom_call.1} parent=1 // pred_region
      %s26 = ssub.s32 3072, 3072
      %27 = vsyncadd [#allocation7], %s26
      %s28 = sshll.u32 [#allocation6], 4
      %s29 = int_to_ptr.vmem [resolvable:$true] %s28
      %34 = dma.hbm_to_vmem [thread:$0]  %s1, 3072, %s29, [#allocation7], 64, 64, 4
    $region9: #{tpu_custom_call.1} parent=1 // pred_fallthru
      _
    // Predicated region
    $region10: #{tpu_custom_call.1} parent=1 // pred_check
      _
    $region11: #{tpu_custom_call.1} parent=1 // pred_check_branch
      %36 = sbr.rel (0) target = $region13
    $region12: #{tpu_custom_call.1} parent=1 // pred_region
      _
    $region13: #{tpu_custom_call.1} parent=1 // pred_fallthru
      _
    // Predicated region
    $region14: #{tpu_custom_call.1} parent=1 // pred_check
      _
    $region15: #{tpu_custom_call.1} parent=1 // pred_check_branch
      %38 = sbr.rel (0) target = $region17
    $region16: #{tpu_custom_call.1} parent=1 // pred_region
      %39 = dma.done [#allocation4], 384
    $region17: #{tpu_custom_call.1} parent=1 // pred_fallthru
      _
    // Predicated region
    $region18: #{tpu_custom_call.1} parent=1 // pred_check
      _
    $region19: #{tpu_custom_call.1} parent=1 // pred_check_branch
      %41 = sbr.rel (0) target = $region21
    $region20: #{tpu_custom_call.1} parent=1 // pred_region
      %42 = dma.done [#allocation7], 3072
    $region21: #{tpu_custom_call.1} parent=1 // pred_fallthru
      _
    %v44 = vld [vmem:[#allocation3] sm:$0xf]
    %v45 = vld [vmem:[#allocation3 + $0x4] sm:$0xf]
    %v46 = vld [vmem:[#allocation3 + $0x8] sm:$0xf]
    %v47 = vld [vmem:[#allocation3 + $0xc] sm:$0xf]
    %v48 = vld [vmem:[#allocation3 + $0x10] sm:$0xf]
    %v49 = vld [vmem:[#allocation3 + $0x14] sm:$0xf]
    %v50 = vld [vmem:[#allocation6] sm:$0xf]
    %v51 = vld [vmem:[#allocation6 + $0x4] sm:$0xf]
    %v52 = vld [vmem:[#allocation6 + $0x8] sm:$0xf]
    %v53 = vld [vmem:[#allocation6 + $0xc] sm:$0xf]
    %v54 = vld [vmem:[#allocation6 + $0x10] sm:$0xf]
    %v55 = vld [vmem:[#allocation6 + $0x14] sm:$0xf]
    %v56 = vld [vmem:[#allocation6 + $0x18] sm:$0xf]
    %v57 = vld [vmem:[#allocation6 + $0x1c] sm:$0xf]
    %v58 = vld [vmem:[#allocation6 + $0x20] sm:$0xf]
    %v59 = vld [vmem:[#allocation6 + $0x24] sm:$0xf]
    %v60 = vld [vmem:[#allocation6 + $0x28] sm:$0xf]
    %v61 = vld [vmem:[#allocation6 + $0x2c] sm:$0xf]
    %v62 = vld [vmem:[#allocation6 + $0x30] sm:$0xf]
    %v63 = vld [vmem:[#allocation6 + $0x34] sm:$0xf]
    %v64 = vld [vmem:[#allocation6 + $0x38] sm:$0xf]
    %v65 = vld [vmem:[#allocation6 + $0x3c] sm:$0xf]
    %v66 = vld [vmem:[%s2] sm:$0x1]
    %v68 = vlaneseq
    %v69 = vshrl.u32 %v68, 7
    %v70 = vsub.s32 0, %v69
    %v71 = vrot.slane %v66, %v70
    %v79 = vunpack.c.l.b16 %v44
    %v80 = vunpack.c.l.b16 %v45
    %v81 = vunpack.c.l.b16 %v46
    %v82 = vunpack.c.l.b16 %v47
    %v83 = vunpack.c.l.b16 %v48
    %v84 = vunpack.c.l.b16 %v49
    %v85 = vpack.c.b16 %v80, %v79
    %v86 = vpack.c.b16 %v82, %v81
    %v87 = vpack.c.b16 %v84, %v83
    %v107 = vunpack.c.l.b16 %v50
    %v108 = vunpack.c.l.b16 %v51
    %v109 = vunpack.c.l.b16 %v52
    %v110 = vunpack.c.l.b16 %v53
    %v111 = vunpack.c.l.b16 %v54
    %v112 = vunpack.c.l.b16 %v55
    %v113 = vunpack.c.l.b16 %v56
    %v114 = vunpack.c.l.b16 %v57
    %v115 = vunpack.c.l.b16 %v58
    %v116 = vunpack.c.l.b16 %v59
    %v117 = vunpack.c.l.b16 %v60
    %v118 = vunpack.c.l.b16 %v61
    %v119 = vunpack.c.l.b16 %v62
    %v120 = vunpack.c.l.b16 %v63
    %v121 = vunpack.c.l.b16 %v64
    %v122 = vunpack.c.l.b16 %v65
    %v123 = vpack.c.b16 %v108, %v107
    %v124 = vpack.c.b16 %v110, %v109
    %v125 = vpack.c.b16 %v112, %v111
    %v126 = vpack.c.b16 %v114, %v113
    %v127 = vpack.c.b16 %v116, %v115
    %v128 = vpack.c.b16 %v118, %v117
    %v129 = vpack.c.b16 %v120, %v119
    %v130 = vpack.c.b16 %v122, %v121
    %139 = vmatprep.subr.bf16.mxu0 0
    %140 = vmatpush1.bf16.msra.mxu0 %v123
    %141 = vmatprep.subr.bf16.mxu0 0
    %142 = vmatpush1.bf16.msra.mxu0 %v124
    %143 = vmatprep.subr.bf16.mxu0 0
    %144 = vmatpush1.bf16.msra.mxu0 %v125
    %145 = vmatprep.subr.bf16.mxu0 0
    %146 = vmatpush1.bf16.msra.mxu0 %v126
    %147 = vmatprep.subr.bf16.mxu0 0
    %148 = vmatpush1.bf16.msra.mxu0 %v127
    %149 = vmatprep.subr.bf16.mxu0 0
    %150 = vmatpush1.bf16.msra.mxu0 %v128
    %151 = vmatprep.subr.bf16.mxu0 0
    %152 = vmatpush1.bf16.msra.mxu0 %v129
    %153 = vmatprep.subr.bf16.mxu0 0
    %154 = vmatpush1.bf16.msra.mxu0 %v130
    %155 = vmatprep.subr.bf16.mxu0 0
    %156 = vmatpush1.bf16.msra.mxu0 0
    %157 = vmatprep.subr.bf16.mxu0 0
    %158 = vmatpush1.bf16.msra.mxu0 0
    %159 = vmatprep.subr.bf16.mxu0 0
    %160 = vmatpush1.bf16.msra.mxu0 0
    %161 = vmatprep.subr.bf16.mxu0 0
    %162 = vmatpush1.bf16.msra.mxu0 0
    %163 = vmatprep.subr.bf16.mxu0 0
    %164 = vmatpush1.bf16.msra.mxu0 0
    %165 = vmatprep.subr.bf16.mxu0 0
    %166 = vmatpush1.bf16.msra.mxu0 0
    %167 = vmatprep.subr.bf16.mxu0 0
    %168 = vmatpush1.bf16.msra.mxu0 0
    %169 = vmatprep.subr.bf16.mxu0 0
    %170 = vmatpush1.bf16.msra.mxu0 0
    %171 = vmatprep.mubr.bf16.mxu0 0
    %172 = vmatmul.mubr.bf16.gmra.mrb[0].mxu0 %v85
    %v173 = vpop.f32.mrb[0].mxu0
    %v174 = vadd.f32 %v71, %v173
    %v175 = vpop.f32.mrb[0].mxu0
    %v176 = vpop.f32.mrb[0].mxu0
    %v177 = vadd.f32 %v71, %v176
    %v178 = vpop.f32.mrb[0].mxu0
    %179 = vmatprep.mubr.bf16.mxu0 0
    %180 = vmatmul.mubr.bf16.gmra.mrb[0].mxu0 %v86
    %v181 = vpop.f32.mrb[0].mxu0
    %v182 = vadd.f32 %v71, %v181
    %v183 = vpop.f32.mrb[0].mxu0
    %v184 = vpop.f32.mrb[0].mxu0
    %v185 = vadd.f32 %v71, %v184
    %v186 = vpop.f32.mrb[0].mxu0
    %187 = vmatprep.mubr.bf16.mxu0 0
    %188 = vmatmul.mubr.bf16.gmra.mrb[0].mxu0 %v87
    %v189 = vpop.f32.mrb[0].mxu0
    %v190 = vadd.f32 %v71, %v189
    %v191 = vpop.f32.mrb[0].mxu0
    %v192 = vpop.f32.mrb[0].mxu0
    %v193 = vadd.f32 %v71, %v192
    %v194 = vpop.f32.mrb[0].mxu0
    %195 = vdwg.mxu0
    %v196 = vmax.f32 %v174, 0.0
    %v197 = vmax.f32 %v177, 0.0
    %v198 = vmax.f32 %v182, 0.0
    %v199 = vmax.f32 %v185, 0.0
    %v200 = vmax.f32 %v190, 0.0
    %v201 = vmax.f32 %v193, 0.0
    %v202 = vpack.c.bf16 %v197, %v196
    %v203 = vpack.c.bf16 %v199, %v198
    %v204 = vpack.c.bf16 %v201, %v200
    %205 = vst [vmem:[#allocation2] sm:$0xff] %v202
    %206 = vst [vmem:[#allocation2 + $0x8] sm:$0xff] %v203
    %207 = vst [vmem:[#allocation2 + $0x10] sm:$0xff] %v204
    %v208 = vld [vmem:[#allocation2] sm:$0xff]
    %v209 = vld [vmem:[#allocation2 + $0x8] sm:$0xff]
    %v210 = vld [vmem:[#allocation2 + $0x10] sm:$0xff]
    %s211 = scalar_lea.vmem [#allocation6], 64
    %v212 = vld [vmem:[%s211] sm:$0xf]
    %v213 = vld [vmem:[%s211 + $0x4] sm:$0xf]
    %v214 = vld [vmem:[%s211 + $0x8] sm:$0xf]
    %v215 = vld [vmem:[%s211 + $0xc] sm:$0xf]
    %v216 = vld [vmem:[%s211 + $0x10] sm:$0xf]
    %v217 = vld [vmem:[%s211 + $0x14] sm:$0xf]
    %v218 = vld [vmem:[%s211 + $0x18] sm:$0xf]
    %v219 = vld [vmem:[%s211 + $0x1c] sm:$0xf]
    %v220 = vld [vmem:[%s211 + $0x20] sm:$0xf]
    %v221 = vld [vmem:[%s211 + $0x24] sm:$0xf]
    %v222 = vld [vmem:[%s211 + $0x28] sm:$0xf]
    %v223 = vld [vmem:[%s211 + $0x2c] sm:$0xf]
    %v224 = vld [vmem:[%s211 + $0x30] sm:$0xf]
    %v225 = vld [vmem:[%s211 + $0x34] sm:$0xf]
    %v226 = vld [vmem:[%s211 + $0x38] sm:$0xf]
    %v227 = vld [vmem:[%s211 + $0x3c] sm:$0xf]
    %s228 = scalar_lea.vmem %s2, 1
    %v229 = vld [vmem:[%s228] sm:$0x1]
    %v231 = vlaneseq
    %v232 = vshrl.u32 %v231, 7
    %v233 = vsub.s32 0, %v232
    %v234 = vrot.slane %v229, %v233
    %v252 = vunpack.c.l.b16 %v212
    %v253 = vunpack.c.l.b16 %v213
    %v254 = vunpack.c.l.b16 %v214
    %v255 = vunpack.c.l.b16 %v215
    %v256 = vunpack.c.l.b16 %v216
    %v257 = vunpack.c.l.b16 %v217
    %v258 = vunpack.c.l.b16 %v218
    %v259 = vunpack.c.l.b16 %v219
    %v260 = vunpack.c.l.b16 %v220
    %v261 = vunpack.c.l.b16 %v221
    %v262 = vunpack.c.l.b16 %v222
    %v263 = vunpack.c.l.b16 %v223
    %v264 = vunpack.c.l.b16 %v224
    %v265 = vunpack.c.l.b16 %v225
    %v266 = vunpack.c.l.b16 %v226
    %v267 = vunpack.c.l.b16 %v227
    %v268 = vpack.c.b16 %v253, %v252
    %v269 = vpack.c.b16 %v255, %v254
    %v270 = vpack.c.b16 %v257, %v256
    %v271 = vpack.c.b16 %v259, %v258
    %v272 = vpack.c.b16 %v261, %v260
    %v273 = vpack.c.b16 %v263, %v262
    %v274 = vpack.c.b16 %v265, %v264
    %v275 = vpack.c.b16 %v267, %v266
    %284 = vmatprep.subr.bf16.mxu0 0
    %285 = vmatpush1.bf16.msra.mxu0 %v268
    %286 = vmatprep.subr.bf16.mxu0 0
    %287 = vmatpush1.bf16.msra.mxu0 %v269
    %288 = vmatprep.subr.bf16.mxu0 0
    %289 = vmatpush1.bf16.msra.mxu0 %v270
    %290 = vmatprep.subr.bf16.mxu0 0
    %291 = vmatpush1.bf16.msra.mxu0 %v271
    %292 = vmatprep.subr.bf16.mxu0 0
    %293 = vmatpush1.bf16.msra.mxu0 %v272
    %294 = vmatprep.subr.bf16.mxu0 0
    %295 = vmatpush1.bf16.msra.mxu0 %v273
    %296 = vmatprep.subr.bf16.mxu0 0
    %297 = vmatpush1.bf16.msra.mxu0 %v274
    %298 = vmatprep.subr.bf16.mxu0 0
    %299 = vmatpush1.bf16.msra.mxu0 %v275
    %300 = vmatprep.subr.bf16.mxu0 0
    %301 = vmatpush1.bf16.msra.mxu0 0
    %302 = vmatprep.subr.bf16.mxu0 0
    %303 = vmatpush1.bf16.msra.mxu0 0
    %304 = vmatprep.subr.bf16.mxu0 0
    %305 = vmatpush1.bf16.msra.mxu0 0
    %306 = vmatprep.subr.bf16.mxu0 0
    %307 = vmatpush1.bf16.msra.mxu0 0
    %308 = vmatprep.subr.bf16.mxu0 0
    %309 = vmatpush1.bf16.msra.mxu0 0
    %310 = vmatprep.subr.bf16.mxu0 0
    %311 = vmatpush1.bf16.msra.mxu0 0
    %312 = vmatprep.subr.bf16.mxu0 0
    %313 = vmatpush1.bf16.msra.mxu0 0
    %314 = vmatprep.subr.bf16.mxu0 0
    %315 = vmatpush1.bf16.msra.mxu0 0
    %316 = vmatprep.mubr.bf16.mxu0 0
    %317 = vmatmul.mubr.bf16.gmra.mrb[0].mxu0 %v208
    %v318 = vpop.f32.mrb[0].mxu0
    %v319 = vadd.f32 %v234, %v318
    %v320 = vpop.f32.mrb[0].mxu0
    %v321 = vpop.f32.mrb[0].mxu0
    %v322 = vadd.f32 %v234, %v321
    %v323 = vpop.f32.mrb[0].mxu0
    %324 = vmatprep.mubr.bf16.mxu0 0
    %325 = vmatmul.mubr.bf16.gmra.mrb[0].mxu0 %v209
    %v326 = vpop.f32.mrb[0].mxu0
    %v327 = vadd.f32 %v234, %v326
    %v328 = vpop.f32.mrb[0].mxu0
    %v329 = vpop.f32.mrb[0].mxu0
    %v330 = vadd.f32 %v234, %v329
    %v331 = vpop.f32.mrb[0].mxu0
    %332 = vmatprep.mubr.bf16.mxu0 0
    %333 = vmatmul.mubr.bf16.gmra.mrb[0].mxu0 %v210
    %v334 = vpop.f32.mrb[0].mxu0
    %v335 = vadd.f32 %v234, %v334
    %v336 = vpop.f32.mrb[0].mxu0
    %v337 = vpop.f32.mrb[0].mxu0
    %v338 = vadd.f32 %v234, %v337
    %v339 = vpop.f32.mrb[0].mxu0
    %340 = vdwg.mxu0
    %v341 = vmax.f32 %v319, 0.0
    %v342 = vmax.f32 %v322, 0.0
    %v343 = vmax.f32 %v327, 0.0
    %v344 = vmax.f32 %v330, 0.0
    %v345 = vmax.f32 %v335, 0.0
    %v346 = vmax.f32 %v338, 0.0
    %v347 = vpack.c.bf16 %v342, %v341
    %v348 = vpack.c.bf16 %v344, %v343
    %v349 = vpack.c.bf16 %v346, %v345
    %350 = vst [vmem:[#allocation2] sm:$0xff] %v347
    %351 = vst [vmem:[#allocation2 + $0x8] sm:$0xff] %v348
    %352 = vst [vmem:[#allocation2 + $0x10] sm:$0xff] %v349
    %v353 = vld [vmem:[#allocation2] sm:$0xff]
    %v354 = vld [vmem:[#allocation2 + $0x8] sm:$0xff]
    %v355 = vld [vmem:[#allocation2 + $0x10] sm:$0xff]
    %s356 = scalar_lea.vmem [#allocation6], 128
    %v357 = vld [vmem:[%s356] sm:$0xf]
    %v358 = vld [vmem:[%s356 + $0x4] sm:$0xf]
    %v359 = vld [vmem:[%s356 + $0x8] sm:$0xf]
    %v360 = vld [vmem:[%s356 + $0xc] sm:$0xf]
    %v361 = vld [vmem:[%s356 + $0x10] sm:$0xf]
    %v362 = vld [vmem:[%s356 + $0x14] sm:$0xf]
    %v363 = vld [vmem:[%s356 + $0x18] sm:$0xf]
    %v364 = vld [vmem:[%s356 + $0x1c] sm:$0xf]
    %v365 = vld [vmem:[%s356 + $0x20] sm:$0xf]
    %v366 = vld [vmem:[%s356 + $0x24] sm:$0xf]
    %v367 = vld [vmem:[%s356 + $0x28] sm:$0xf]
    %v368 = vld [vmem:[%s356 + $0x2c] sm:$0xf]
    %v369 = vld [vmem:[%s356 + $0x30] sm:$0xf]
    %v370 = vld [vmem:[%s356 + $0x34] sm:$0xf]
    %v371 = vld [vmem:[%s356 + $0x38] sm:$0xf]
    %v372 = vld [vmem:[%s356 + $0x3c] sm:$0xf]
    %s373 = scalar_lea.vmem %s2, 2
    %v374 = vld [vmem:[%s373] sm:$0x1]
    %v376 = vlaneseq
    %v377 = vshrl.u32 %v376, 7
    %v378 = vsub.s32 0, %v377
    %v379 = vrot.slane %v374, %v378
    %v397 = vunpack.c.l.b16 %v357
    %v398 = vunpack.c.l.b16 %v358
    %v399 = vunpack.c.l.b16 %v359
    %v400 = vunpack.c.l.b16 %v360
    %v401 = vunpack.c.l.b16 %v361
    %v402 = vunpack.c.l.b16 %v362
    %v403 = vunpack.c.l.b16 %v363
    %v404 = vunpack.c.l.b16 %v364
    %v405 = vunpack.c.l.b16 %v365
    %v406 = vunpack.c.l.b16 %v366
    %v407 = vunpack.c.l.b16 %v367
    %v408 = vunpack.c.l.b16 %v368
    %v409 = vunpack.c.l.b16 %v369
    %v410 = vunpack.c.l.b16 %v370
    %v411 = vunpack.c.l.b16 %v371
    %v412 = vunpack.c.l.b16 %v372
    %v413 = vpack.c.b16 %v398, %v397
    %v414 = vpack.c.b16 %v400, %v399
    %v415 = vpack.c.b16 %v402, %v401
    %v416 = vpack.c.b16 %v404, %v403
    %v417 = vpack.c.b16 %v406, %v405
    %v418 = vpack.c.b16 %v408, %v407
    %v419 = vpack.c.b16 %v410, %v409
    %v420 = vpack.c.b16 %v412, %v411
    %429 = vmatprep.subr.bf16.mxu0 0
    %430 = vmatpush1.bf16.msra.mxu0 %v413
    %431 = vmatprep.subr.bf16.mxu0 0
    %432 = vmatpush1.bf16.msra.mxu0 %v414
    %433 = vmatprep.subr.bf16.mxu0 0
    %434 = vmatpush1.bf16.msra.mxu0 %v415
    %435 = vmatprep.subr.bf16.mxu0 0
    %436 = vmatpush1.bf16.msra.mxu0 %v416
    %437 = vmatprep.subr.bf16.mxu0 0
    %438 = vmatpush1.bf16.msra.mxu0 %v417
    %439 = vmatprep.subr.bf16.mxu0 0
    %440 = vmatpush1.bf16.msra.mxu0 %v418
    %441 = vmatprep.subr.bf16.mxu0 0
    %442 = vmatpush1.bf16.msra.mxu0 %v419
    %443 = vmatprep.subr.bf16.mxu0 0
    %444 = vmatpush1.bf16.msra.mxu0 %v420
    %445 = vmatprep.subr.bf16.mxu0 0
    %446 = vmatpush1.bf16.msra.mxu0 0
    %447 = vmatprep.subr.bf16.mxu0 0
    %448 = vmatpush1.bf16.msra.mxu0 0
    %449 = vmatprep.subr.bf16.mxu0 0
    %450 = vmatpush1.bf16.msra.mxu0 0
    %451 = vmatprep.subr.bf16.mxu0 0
    %452 = vmatpush1.bf16.msra.mxu0 0
    %453 = vmatprep.subr.bf16.mxu0 0
    %454 = vmatpush1.bf16.msra.mxu0 0
    %455 = vmatprep.subr.bf16.mxu0 0
    %456 = vmatpush1.bf16.msra.mxu0 0
    %457 = vmatprep.subr.bf16.mxu0 0
    %458 = vmatpush1.bf16.msra.mxu0 0
    %459 = vmatprep.subr.bf16.mxu0 0
    %460 = vmatpush1.bf16.msra.mxu0 0
    %461 = vmatprep.mubr.bf16.mxu0 0
    %462 = vmatmul.mubr.bf16.gmra.mrb[0].mxu0 %v353
    %v463 = vpop.f32.mrb[0].mxu0
    %v464 = vadd.f32 %v379, %v463
    %v465 = vpop.f32.mrb[0].mxu0
    %v466 = vpop.f32.mrb[0].mxu0
    %v467 = vadd.f32 %v379, %v466
    %v468 = vpop.f32.mrb[0].mxu0
    %469 = vmatprep.mubr.bf16.mxu0 0
    %470 = vmatmul.mubr.bf16.gmra.mrb[0].mxu0 %v354
    %v471 = vpop.f32.mrb[0].mxu0
    %v472 = vadd.f32 %v379, %v471
    %v473 = vpop.f32.mrb[0].mxu0
    %v474 = vpop.f32.mrb[0].mxu0
    %v475 = vadd.f32 %v379, %v474
    %v476 = vpop.f32.mrb[0].mxu0
    %477 = vmatprep.mubr.bf16.mxu0 0
    %478 = vmatmul.mubr.bf16.gmra.mrb[0].mxu0 %v355
    %v479 = vpop.f32.mrb[0].mxu0
    %v480 = vadd.f32 %v379, %v479
    %v481 = vpop.f32.mrb[0].mxu0
    %v482 = vpop.f32.mrb[0].mxu0
    %v483 = vadd.f32 %v379, %v482
    %v484 = vpop.f32.mrb[0].mxu0
    %485 = vdwg.mxu0
    %486 = vst [vmem:[#allocation8] sm:$0xff] %v464
    %487 = vst [vmem:[#allocation8 + $0x8] sm:$0xff] %v467
    %488 = vst [vmem:[#allocation8 + $0x10] sm:$0xff] %v472
    %489 = vst [vmem:[#allocation8 + $0x18] sm:$0xff] %v475
    %490 = vst [vmem:[#allocation8 + $0x20] sm:$0xff] %v480
    %491 = vst [vmem:[#allocation8 + $0x28] sm:$0xff] %v483
    // Predicated region
    $region22: #{tpu_custom_call.1} parent=1 // pred_check
      _
    $region23: #{tpu_custom_call.1} parent=1 // pred_check_branch
      %493 = sbr.rel (0) target = $region25
    $region24: #{tpu_custom_call.1} parent=1 // pred_region
      %s495 = ssub.s32 768, 768
      %496 = vsyncadd [#allocation5], %s495
      %s497 = sshll.u32 [#allocation8], 4
      %s498 = int_to_ptr.vmem [resolvable:$true] %s497
      %503 = dma.vmem_to_hbm [thread:$0]  %s498, 768, %s3, [#allocation5], 128, 128, 8
    $region25: #{tpu_custom_call.1} parent=1 // pred_fallthru
      _
    // Predicated region
    $region26: #{tpu_custom_call.1} parent=1 // pred_check
      _
    $region27: #{tpu_custom_call.1} parent=1 // pred_check_branch
      %505 = sbr.rel (0) target = $region29
    $region28: #{tpu_custom_call.1} parent=1 // pred_region
      %506 = dma.done [#allocation5], 768
    $region29: #{tpu_custom_call.1} parent=1 // pred_fallthru
      _
    %507 = vsyncpa [#allocation4], 1
    %508 = vsyncpa [#allocation7], 1
    %509 = vsyncpa [#allocation5], 1

// kernel: tpu_custom_call.1
$region0: #{tpu_custom_call.1}
  #allocation0 [shape = 'u32[]', space=smem, size = 0x4, offset = 0x4, fixed_abs, tag = 'smem constant byte address 0x4 - core index']
  #allocation1 [shape = 'u32[144,128]{1,0:T(1,128)}', space=vmem, size = 0x12000, scoped, tag = 'internal scratch']
  #allocation2 [shape = 'bf16[48,128]{1,0:T(16,128)(2,1)}', space=vmem, size = 0x3000, scoped, tag = 'scratch operand']
  %s0 = inlined_call_operand.hbm [shape: bf16[48,128], index: 0, kind: input, shape index: {}]
  %s1 = inlined_call_operand.hbm [shape: bf16[3,128,128], index: 1, kind: input, shape index: {}]
  %s2 = inlined_call_operand.vmem [shape: f32[3,1,128], index: 2, kind: input, shape index: {}]
  %s3 = inlined_call_operand.hbm [shape: f32[48,128], index: 3, kind: output, shape index: {}]
  %s4 = sld [smem:[#allocation0]]
  $region30: #{tpu_custom_call.1} parent=0
    _
  %s6 = ssub.s32 1, %s4
  %s7 = scalar_select 0, %s6, %s4
  $region1: #{tpu_custom_call.1} parent=0
    #allocation3 [shape = 'u8[12288]{0}', space=vmem, size = 0x3000, scoped, tag = 'input window, operand 0, single buffered']
    #allocation4 [shape = 's32[1]{0}', space=sflag, size = 0x4, scoped, tag = 'scoped memory for tpu_custom_call.1']
    #allocation5 [shape = 's32[1]{0}', space=sflag, size = 0x4, scoped, tag = 'scoped memory for tpu_custom_call.1']
    #allocation6 [shape = 'u8[98304]{0}', space=vmem, size = 0x18000, scoped, tag = 'input window, operand 1, single buffered']
    #allocation7 [shape = 's32[1]{0}', space=sflag, size = 0x4, scoped, tag = 'scoped memory for tpu_custom_call.1']
    #allocation8 [shape = 'u8[24576]{0}', space=vmem, size = 0x6000, scoped, tag = 'output window, operand 0, single buffered']
    %8 = vsyncpa [#allocation4], 0
    %9 = vsyncpa [#allocation7], 0
    %10 = vsyncpa [#allocation5], 0
    // Predicated region
    $region2: #{tpu_custom_call.1} parent=1 // pred_check
      _
    $region3: #{tpu_custom_call.1} parent=1 // pred_check_branch
      %12 = sbr.rel (0) target = $region5
    $region4: #{tpu_custom_call.1} parent=1 // pred_region
      %s14 = ssub.s32 384, 384
      %15 = vsyncadd [#allocation4], %s14
      %s16 = sshll.u32 [#allocation3], 4
      %s17 = int_to_ptr.vmem [resolvable:$true] %s16
      %22 = dma.hbm_to_vmem [thread:$0]  %s0, 384, %s17, [#allocation4], 64, 64, 4
    $region5: #{tpu_custom_call.1} parent=1 // pred_fallthru
      _
    // Predicated region
    $region6: #{tpu_custom_call.1} parent=1 // pred_check
      _
    $region7: #{tpu_custom_call.1} parent=1 // pred_check_branch
      %24 = sbr.rel (0) target = $region9
    $region8: #{tpu_custom_call.1} parent=1 // pred_region
      %s26 = ssub.s32 3072, 3072
      %27 = vsyncadd [#allocation7], %s26
      %s28 = sshll.u32 [#allocation6], 4
      %s29 = int_to_ptr.vmem [resolvable:$true] %s28
      %34 = dma.hbm_to_vmem [thread:$0]  %s1, 3072, %s29, [#allocation7], 64, 64, 4
    $region9: #{tpu_custom_call.1} parent=1 // pred_fallthru
      _
    // Predicated region
    $region10: #{tpu_custom_call.1} parent=1 // pred_check
      _
    $region11: #{tpu_custom_call.1} parent=1 // pred_check_branch
      %36 = sbr.rel (0) target = $region13
    $region12: #{tpu_custom_call.1} parent=1 // pred_region
      _
    $region13: #{tpu_custom_call.1} parent=1 // pred_fallthru
      _
    // Predicated region
    $region14: #{tpu_custom_call.1} parent=1 // pred_check
      _
    $region15: #{tpu_custom_call.1} parent=1 // pred_check_branch
      %38 = sbr.rel (0) target = $region17
    $region16: #{tpu_custom_call.1} parent=1 // pred_region
      %39 = dma.done [#allocation4], 384
    $region17: #{tpu_custom_call.1} parent=1 // pred_fallthru
      _
    // Predicated region
    $region18: #{tpu_custom_call.1} parent=1 // pred_check
      _
    $region19: #{tpu_custom_call.1} parent=1 // pred_check_branch
      %41 = sbr.rel (0) target = $region21
    $region20: #{tpu_custom_call.1} parent=1 // pred_region
      %42 = dma.done [#allocation7], 3072
    $region21: #{tpu_custom_call.1} parent=1 // pred_fallthru
      _
    %v44 = vld [vmem:[#allocation3] sm:$0xf]
    %v45 = vld [vmem:[#allocation3 + $0x4] sm:$0xf]
    %v46 = vld [vmem:[#allocation3 + $0x8] sm:$0xf]
    %v47 = vld [vmem:[#allocation3 + $0xc] sm:$0xf]
    %v48 = vld [vmem:[#allocation3 + $0x10] sm:$0xf]
    %v49 = vld [vmem:[#allocation3 + $0x14] sm:$0xf]
    %v50 = vld [vmem:[#allocation6] sm:$0xf]
    %v51 = vld [vmem:[#allocation6 + $0x4] sm:$0xf]
    %v52 = vld [vmem:[#allocation6 + $0x8] sm:$0xf]
    %v53 = vld [vmem:[#allocation6 + $0xc] sm:$0xf]
    %v54 = vld [vmem:[#allocation6 + $0x10] sm:$0xf]
    %v55 = vld [vmem:[#allocation6 + $0x14] sm:$0xf]
    %v56 = vld [vmem:[#allocation6 + $0x18] sm:$0xf]
    %v57 = vld [vmem:[#allocation6 + $0x1c] sm:$0xf]
    %v58 = vld [vmem:[#allocation6 + $0x20] sm:$0xf]
    %v59 = vld [vmem:[#allocation6 + $0x24] sm:$0xf]
    %v60 = vld [vmem:[#allocation6 + $0x28] sm:$0xf]
    %v61 = vld [vmem:[#allocation6 + $0x2c] sm:$0xf]
    %v62 = vld [vmem:[#allocation6 + $0x30] sm:$0xf]
    %v63 = vld [vmem:[#allocation6 + $0x34] sm:$0xf]
    %v64 = vld [vmem:[#allocation6 + $0x38] sm:$0xf]
    %v65 = vld [vmem:[#allocation6 + $0x3c] sm:$0xf]
    %v66 = vld [vmem:[%s2] sm:$0x1]
    %v68 = vlaneseq
    %v69 = vshrl.u32 %v68, 7
    %v70 = vsub.s32 0, %v69
    %v71 = vrot.slane %v66, %v70
    %v79 = vunpack.c.l.b16 %v44
    %v80 = vunpack.c.l.b16 %v45
    %v81 = vunpack.c.l.b16 %v46
    %v82 = vunpack.c.l.b16 %v47
    %v83 = vunpack.c.l.b16 %v48
    %v84 = vunpack.c.l.b16 %v49
    %v85 = vpack.c.b16 %v80, %v79
    %v86 = vpack.c.b16 %v82, %v81
    %v87 = vpack.c.b16 %v84, %v83
    %v107 = vunpack.c.l.b16 %v50
    %v108 = vunpack.c.l.b16 %v51
    %v109 = vunpack.c.l.b16 %v52
    %v110 = vunpack.c.l.b16 %v53
    %v111 = vunpack.c.l.b16 %v54
    %v112 = vunpack.c.l.b16 %v55
    %v113 = vunpack.c.l.b16 %v56
    %v114 = vunpack.c.l.b16 %v57
    %v115 = vunpack.c.l.b16 %v58
    %v116 = vunpack.c.l.b16 %v59
    %v117 = vunpack.c.l.b16 %v60
    %v118 = vunpack.c.l.b16 %v61
    %v119 = vunpack.c.l.b16 %v62
    %v120 = vunpack.c.l.b16 %v63
    %v121 = vunpack.c.l.b16 %v64
    %v122 = vunpack.c.l.b16 %v65
    %v123 = vpack.c.b16 %v108, %v107
    %v124 = vpack.c.b16 %v110, %v109
    %v125 = vpack.c.b16 %v112, %v111
    %v126 = vpack.c.b16 %v114, %v113
    %v127 = vpack.c.b16 %v116, %v115
    %v128 = vpack.c.b16 %v118, %v117
    %v129 = vpack.c.b16 %v120, %v119
    %v130 = vpack.c.b16 %v122, %v121
    %139 = vmatprep.subr.bf16.mxu0 0
    %140 = vmatpush1.bf16.msra.mxu0 %v123
    %141 = vmatprep.subr.bf16.mxu0 0
    %142 = vmatpush1.bf16.msra.mxu0 %v124
    %143 = vmatprep.subr.bf16.mxu0 0
    %144 = vmatpush1.bf16.msra.mxu0 %v125
    %145 = vmatprep.subr.bf16.mxu0 0
    %146 = vmatpush1.bf16.msra.mxu0 %v126
    %147 = vmatprep.subr.bf16.mxu0 0
    %148 = vmatpush1.bf16.msra.mxu0 %v127
    %149 = vmatprep.subr.bf16.mxu0 0
    %150 = vmatpush1.bf16.msra.mxu0 %v128
    %151 = vmatprep.subr.bf16.mxu0 0
    %152 = vmatpush1.bf16.msra.mxu0 %v129
    %153 = vmatprep.subr.bf16.mxu0 0
    %154 = vmatpush1.bf16.msra.mxu0 %v130
    %155 = vmatprep.subr.bf16.mxu0 0
    %156 = vmatpush1.bf16.msra.mxu0 0
    %157 = vmatprep.subr.bf16.mxu0 0
    %158 = vmatpush1.bf16.msra.mxu0 0
    %159 = vmatprep.subr.bf16.mxu0 0
    %160 = vmatpush1.bf16.msra.mxu0 0
    %161 = vmatprep.subr.bf16.mxu0 0
    %162 = vmatpush1.bf16.msra.mxu0 0
    %163 = vmatprep.subr.bf16.mxu0 0
    %164 = vmatpush1.bf16.msra.mxu0 0
    %165 = vmatprep.subr.bf16.mxu0 0
    %166 = vmatpush1.bf16.msra.mxu0 0
    %167 = vmatprep.subr.bf16.mxu0 0
    %168 = vmatpush1.bf16.msra.mxu0 0
    %169 = vmatprep.subr.bf16.mxu0 0
    %170 = vmatpush1.bf16.msra.mxu0 0
    %171 = vmatprep.mubr.bf16.mxu0 0
    %172 = vmatmul.mubr.bf16.gmra.mrb[0].mxu0 %v85
    %v173 = vpop.f32.mrb[0].mxu0
    %v174 = vadd.f32 %v71, %v173
    %v175 = vpop.f32.mrb[0].mxu0
    %v176 = vpop.f32.mrb[0].mxu0
    %v177 = vadd.f32 %v71, %v176
    %v178 = vpop.f32.mrb[0].mxu0
    %179 = vmatprep.mubr.bf16.mxu0 0
    %180 = vmatmul.mubr.bf16.gmra.mrb[0].mxu0 %v86
    %v181 = vpop.f32.mrb[0].mxu0
    %v182 = vadd.f32 %v71, %v181
    %v183 = vpop.f32.mrb[0].mxu0
    %v184 = vpop.f32.mrb[0].mxu0
    %v185 = vadd.f32 %v71, %v184
    %v186 = vpop.f32.mrb[0].mxu0
    %187 = vmatprep.mubr.bf16.mxu0 0
    %188 = vmatmul.mubr.bf16.gmra.mrb[0].mxu0 %v87
    %v189 = vpop.f32.mrb[0].mxu0
    %v190 = vadd.f32 %v71, %v189
    %v191 = vpop.f32.mrb[0].mxu0
    %v192 = vpop.f32.mrb[0].mxu0
    %v193 = vadd.f32 %v71, %v192
    %v194 = vpop.f32.mrb[0].mxu0
    %195 = vdwg.mxu0
    %v196 = vmax.f32 %v174, 0.0
    %v197 = vmax.f32 %v177, 0.0
    %v198 = vmax.f32 %v182, 0.0
    %v199 = vmax.f32 %v185, 0.0
    %v200 = vmax.f32 %v190, 0.0
    %v201 = vmax.f32 %v193, 0.0
    %v202 = vpack.c.bf16 %v197, %v196
    %v203 = vpack.c.bf16 %v199, %v198
    %v204 = vpack.c.bf16 %v201, %v200
    %205 = vst [vmem:[#allocation2] sm:$0xff] %v202
    %206 = vst [vmem:[#allocation2 + $0x8] sm:$0xff] %v203
    %207 = vst [vmem:[#allocation2 + $0x10] sm:$0xff] %v204
    %v208 = vld [vmem:[#allocation2] sm:$0xff]
    %v209 = vld [vmem:[#allocation2 + $0x8] sm:$0xff]
    %v210 = vld [vmem:[#allocation2 + $0x10] sm:$0xff]
    %s211 = scalar_lea.vmem [#allocation6], 64
    %v212 = vld [vmem:[%s211] sm:$0xf]
    %v213 = vld [vmem:[%s211 + $0x4] sm:$0xf]
    %v214 = vld [vmem:[%s211 + $0x8] sm:$0xf]
    %v215 = vld [vmem:[%s211 + $0xc] sm:$0xf]
    %v216 = vld [vmem:[%s211 + $0x10] sm:$0xf]
    %v217 = vld [vmem:[%s211 + $0x14] sm:$0xf]
    %v218 = vld [vmem:[%s211 + $0x18] sm:$0xf]
    %v219 = vld [vmem:[%s211 + $0x1c] sm:$0xf]
    %v220 = vld [vmem:[%s211 + $0x20] sm:$0xf]
    %v221 = vld [vmem:[%s211 + $0x24] sm:$0xf]
    %v222 = vld [vmem:[%s211 + $0x28] sm:$0xf]
    %v223 = vld [vmem:[%s211 + $0x2c] sm:$0xf]
    %v224 = vld [vmem:[%s211 + $0x30] sm:$0xf]
    %v225 = vld [vmem:[%s211 + $0x34] sm:$0xf]
    %v226 = vld [vmem:[%s211 + $0x38] sm:$0xf]
    %v227 = vld [vmem:[%s211 + $0x3c] sm:$0xf]
    %s228 = scalar_lea.vmem %s2, 1
    %v229 = vld [vmem:[%s228] sm:$0x1]
    %v231 = vlaneseq
    %v232 = vshrl.u32 %v231, 7
    %v233 = vsub.s32 0, %v232
    %v234 = vrot.slane %v229, %v233
    %v252 = vunpack.c.l.b16 %v212
    %v253 = vunpack.c.l.b16 %v213
    %v254 = vunpack.c.l.b16 %v214
    %v255 = vunpack.c.l.b16 %v215
    %v256 = vunpack.c.l.b16 %v216
    %v257 = vunpack.c.l.b16 %v217
    %v258 = vunpack.c.l.b16 %v218
    %v259 = vunpack.c.l.b16 %v219
    %v260 = vunpack.c.l.b16 %v220
    %v261 = vunpack.c.l.b16 %v221
    %v262 = vunpack.c.l.b16 %v222
    %v263 = vunpack.c.l.b16 %v223
    %v264 = vunpack.c.l.b16 %v224
    %v265 = vunpack.c.l.b16 %v225
    %v266 = vunpack.c.l.b16 %v226
    %v267 = vunpack.c.l.b16 %v227
    %v268 = vpack.c.b16 %v253, %v252
    %v269 = vpack.c.b16 %v255, %v254
    %v270 = vpack.c.b16 %v257, %v256
    %v271 = vpack.c.b16 %v259, %v258
    %v272 = vpack.c.b16 %v261, %v260
    %v273 = vpack.c.b16 %v263, %v262
    %v274 = vpack.c.b16 %v265, %v264
    %v275 = vpack.c.b16 %v267, %v266
    %284 = vmatprep.subr.bf16.mxu0 0
    %285 = vmatpush1.bf16.msra.mxu0 %v268
    %286 = vmatprep.subr.bf16.mxu0 0
    %287 = vmatpush1.bf16.msra.mxu0 %v269
    %288 = vmatprep.subr.bf16.mxu0 0
    %289 = vmatpush1.bf16.msra.mxu0 %v270
    %290 = vmatprep.subr.bf16.mxu0 0
    %291 = vmatpush1.bf16.msra.mxu0 %v271
    %292 = vmatprep.subr.bf16.mxu0 0
    %293 = vmatpush1.bf16.msra.mxu0 %v272
    %294 = vmatprep.subr.bf16.mxu0 0
    %295 = vmatpush1.bf16.msra.mxu0 %v273
    %296 = vmatprep.subr.bf16.mxu0 0
    %297 = vmatpush1.bf16.msra.mxu0 %v274
    %298 = vmatprep.subr.bf16.mxu0 0
    %299 = vmatpush1.bf16.msra.mxu0 %v275
    %300 = vmatprep.subr.bf16.mxu0 0
    %301 = vmatpush1.bf16.msra.mxu0 0
    %302 = vmatprep.subr.bf16.mxu0 0
    %303 = vmatpush1.bf16.msra.mxu0 0
    %304 = vmatprep.subr.bf16.mxu0 0
    %305 = vmatpush1.bf16.msra.mxu0 0
    %306 = vmatprep.subr.bf16.mxu0 0
    %307 = vmatpush1.bf16.msra.mxu0 0
    %308 = vmatprep.subr.bf16.mxu0 0
    %309 = vmatpush1.bf16.msra.mxu0 0
    %310 = vmatprep.subr.bf16.mxu0 0
    %311 = vmatpush1.bf16.msra.mxu0 0
    %312 = vmatprep.subr.bf16.mxu0 0
    %313 = vmatpush1.bf16.msra.mxu0 0
    %314 = vmatprep.subr.bf16.mxu0 0
    %315 = vmatpush1.bf16.msra.mxu0 0
    %316 = vmatprep.mubr.bf16.mxu0 0
    %317 = vmatmul.mubr.bf16.gmra.mrb[0].mxu0 %v208
    %v318 = vpop.f32.mrb[0].mxu0
    %v319 = vadd.f32 %v234, %v318
    %v320 = vpop.f32.mrb[0].mxu0
    %v321 = vpop.f32.mrb[0].mxu0
    %v322 = vadd.f32 %v234, %v321
    %v323 = vpop.f32.mrb[0].mxu0
    %324 = vmatprep.mubr.bf16.mxu0 0
    %325 = vmatmul.mubr.bf16.gmra.mrb[0].mxu0 %v209
    %v326 = vpop.f32.mrb[0].mxu0
    %v327 = vadd.f32 %v234, %v326
    %v328 = vpop.f32.mrb[0].mxu0
    %v329 = vpop.f32.mrb[0].mxu0
    %v330 = vadd.f32 %v234, %v329
    %v331 = vpop.f32.mrb[0].mxu0
    %332 = vmatprep.mubr.bf16.mxu0 0
    %333 = vmatmul.mubr.bf16.gmra.mrb[0].mxu0 %v210
    %v334 = vpop.f32.mrb[0].mxu0
    %v335 = vadd.f32 %v234, %v334
    %v336 = vpop.f32.mrb[0].mxu0
    %v337 = vpop.f32.mrb[0].mxu0
    %v338 = vadd.f32 %v234, %v337
    %v339 = vpop.f32.mrb[0].mxu0
    %340 = vdwg.mxu0
    %v341 = vmax.f32 %v319, 0.0
    %v342 = vmax.f32 %v322, 0.0
    %v343 = vmax.f32 %v327, 0.0
    %v344 = vmax.f32 %v330, 0.0
    %v345 = vmax.f32 %v335, 0.0
    %v346 = vmax.f32 %v338, 0.0
    %v347 = vpack.c.bf16 %v342, %v341
    %v348 = vpack.c.bf16 %v344, %v343
    %v349 = vpack.c.bf16 %v346, %v345
    %350 = vst [vmem:[#allocation2] sm:$0xff] %v347
    %351 = vst [vmem:[#allocation2 + $0x8] sm:$0xff] %v348
    %352 = vst [vmem:[#allocation2 + $0x10] sm:$0xff] %v349
    %v353 = vld [vmem:[#allocation2] sm:$0xff]
    %v354 = vld [vmem:[#allocation2 + $0x8] sm:$0xff]
    %v355 = vld [vmem:[#allocation2 + $0x10] sm:$0xff]
    %s356 = scalar_lea.vmem [#allocation6], 128
    %v357 = vld [vmem:[%s356] sm:$0xf]
    %v358 = vld [vmem:[%s356 + $0x4] sm:$0xf]
    %v359 = vld [vmem:[%s356 + $0x8] sm:$0xf]
    %v360 = vld [vmem:[%s356 + $0xc] sm:$0xf]
    %v361 = vld [vmem:[%s356 + $0x10] sm:$0xf]
    %v362 = vld [vmem:[%s356 + $0x14] sm:$0xf]
    %v363 = vld [vmem:[%s356 + $0x18] sm:$0xf]
    %v364 = vld [vmem:[%s356 + $0x1c] sm:$0xf]
    %v365 = vld [vmem:[%s356 + $0x20] sm:$0xf]
    %v366 = vld [vmem:[%s356 + $0x24] sm:$0xf]
    %v367 = vld [vmem:[%s356 + $0x28] sm:$0xf]
    %v368 = vld [vmem:[%s356 + $0x2c] sm:$0xf]
    %v369 = vld [vmem:[%s356 + $0x30] sm:$0xf]
    %v370 = vld [vmem:[%s356 + $0x34] sm:$0xf]
    %v371 = vld [vmem:[%s356 + $0x38] sm:$0xf]
    %v372 = vld [vmem:[%s356 + $0x3c] sm:$0xf]
    %s373 = scalar_lea.vmem %s2, 2
    %v374 = vld [vmem:[%s373] sm:$0x1]
    %v376 = vlaneseq
    %v377 = vshrl.u32 %v376, 7
    %v378 = vsub.s32 0, %v377
    %v379 = vrot.slane %v374, %v378
    %v397 = vunpack.c.l.b16 %v357
    %v398 = vunpack.c.l.b16 %v358
    %v399 = vunpack.c.l.b16 %v359
    %v400 = vunpack.c.l.b16 %v360
    %v401 = vunpack.c.l.b16 %v361
    %v402 = vunpack.c.l.b16 %v362
    %v403 = vunpack.c.l.b16 %v363
    %v404 = vunpack.c.l.b16 %v364
    %v405 = vunpack.c.l.b16 %v365
    %v406 = vunpack.c.l.b16 %v366
    %v407 = vunpack.c.l.b16 %v367
    %v408 = vunpack.c.l.b16 %v368
    %v409 = vunpack.c.l.b16 %v369
    %v410 = vunpack.c.l.b16 %v370
    %v411 = vunpack.c.l.b16 %v371
    %v412 = vunpack.c.l.b16 %v372
    %v413 = vpack.c.b16 %v398, %v397
    %v414 = vpack.c.b16 %v400, %v399
    %v415 = vpack.c.b16 %v402, %v401
    %v416 = vpack.c.b16 %v404, %v403
    %v417 = vpack.c.b16 %v406, %v405
    %v418 = vpack.c.b16 %v408, %v407
    %v419 = vpack.c.b16 %v410, %v409
    %v420 = vpack.c.b16 %v412, %v411
    %429 = vmatprep.subr.bf16.mxu0 0
    %430 = vmatpush1.bf16.msra.mxu0 %v413
    %431 = vmatprep.subr.bf16.mxu0 0
    %432 = vmatpush1.bf16.msra.mxu0 %v414
    %433 = vmatprep.subr.bf16.mxu0 0
    %434 = vmatpush1.bf16.msra.mxu0 %v415
    %435 = vmatprep.subr.bf16.mxu0 0
    %436 = vmatpush1.bf16.msra.mxu0 %v416
    %437 = vmatprep.subr.bf16.mxu0 0
    %438 = vmatpush1.bf16.msra.mxu0 %v417
    %439 = vmatprep.subr.bf16.mxu0 0
    %440 = vmatpush1.bf16.msra.mxu0 %v418
    %441 = vmatprep.subr.bf16.mxu0 0
    %442 = vmatpush1.bf16.msra.mxu0 %v419
    %443 = vmatprep.subr.bf16.mxu0 0
    %444 = vmatpush1.bf16.msra.mxu0 %v420
    %445 = vmatprep.subr.bf16.mxu0 0
    %446 = vmatpush1.bf16.msra.mxu0 0
    %447 = vmatprep.subr.bf16.mxu0 0
    %448 = vmatpush1.bf16.msra.mxu0 0
    %449 = vmatprep.subr.bf16.mxu0 0
    %450 = vmatpush1.bf16.msra.mxu0 0
    %451 = vmatprep.subr.bf16.mxu0 0
    %452 = vmatpush1.bf16.msra.mxu0 0
    %453 = vmatprep.subr.bf16.mxu0 0
    %454 = vmatpush1.bf16.msra.mxu0 0
    %455 = vmatprep.subr.bf16.mxu0 0
    %456 = vmatpush1.bf16.msra.mxu0 0
    %457 = vmatprep.subr.bf16.mxu0 0
    %458 = vmatpush1.bf16.msra.mxu0 0
    %459 = vmatprep.subr.bf16.mxu0 0
    %460 = vmatpush1.bf16.msra.mxu0 0
    %461 = vmatprep.mubr.bf16.mxu0 0
    %462 = vmatmul.mubr.bf16.gmra.mrb[0].mxu0 %v353
    %v463 = vpop.f32.mrb[0].mxu0
    %v464 = vadd.f32 %v379, %v463
    %v465 = vpop.f32.mrb[0].mxu0
    %v466 = vpop.f32.mrb[0].mxu0
    %v467 = vadd.f32 %v379, %v466
    %v468 = vpop.f32.mrb[0].mxu0
    %469 = vmatprep.mubr.bf16.mxu0 0
    %470 = vmatmul.mubr.bf16.gmra.mrb[0].mxu0 %v354
    %v471 = vpop.f32.mrb[0].mxu0
    %v472 = vadd.f32 %v379, %v471
    %v473 = vpop.f32.mrb[0].mxu0
    %v474 = vpop.f32.mrb[0].mxu0
    %v475 = vadd.f32 %v379, %v474
    %v476 = vpop.f32.mrb[0].mxu0
    %477 = vmatprep.mubr.bf16.mxu0 0
    %478 = vmatmul.mubr.bf16.gmra.mrb[0].mxu0 %v355
    %v479 = vpop.f32.mrb[0].mxu0
    %v480 = vadd.f32 %v379, %v479
    %v481 = vpop.f32.mrb[0].mxu0
    %v482 = vpop.f32.mrb[0].mxu0
    %v483 = vadd.f32 %v379, %v482
    %v484 = vpop.f32.mrb[0].mxu0
    %485 = vdwg.mxu0
    %486 = vst [vmem:[#allocation8] sm:$0xff] %v464
    %487 = vst [vmem:[#allocation8 + $0x8] sm:$0xff] %v467
    %488 = vst [vmem:[#allocation8 + $0x10] sm:$0xff] %v472
    %489 = vst [vmem:[#allocation8 + $0x18] sm:$0xff] %v475
    %490 = vst [vmem:[#allocation8 + $0x20] sm:$0xff] %v480
    %491 = vst [vmem:[#allocation8 + $0x28] sm:$0xff] %v483
    // Predicated region
    $region22: #{tpu_custom_call.1} parent=1 // pred_check
      _
    $region23: #{tpu_custom_call.1} parent=1 // pred_check_branch
      %493 = sbr.rel (0) target = $region25
    $region24: #{tpu_custom_call.1} parent=1 // pred_region
      %s495 = ssub.s32 768, 768
      %496 = vsyncadd [#allocation5], %s495
      %s497 = sshll.u32 [#allocation8], 4
      %s498 = int_to_ptr.vmem [resolvable:$true] %s497
      %503 = dma.vmem_to_hbm [thread:$0]  %s498, 768, %s3, [#allocation5], 128, 128, 8
    $region25: #{tpu_custom_call.1} parent=1 // pred_fallthru
      _
    // Predicated region
    $region26: #{tpu_custom_call.1} parent=1 // pred_check
      _
    $region27: #{tpu_custom_call.1} parent=1 // pred_check_branch
      %505 = sbr.rel (0) target = $region29
    $region28: #{tpu_custom_call.1} parent=1 // pred_region
      %506 = dma.done [#allocation5], 768
    $region29: #{tpu_custom_call.1} parent=1 // pred_fallthru
      _
    %507 = vsyncpa [#allocation4], 1
    %508 = vsyncpa [#allocation7], 1
    %509 = vsyncpa [#allocation5], 1

</llo_original>
